<compile_context>
chip_gen: v5e
topology: v5e:2x2
jax: 0.10.0
libtpu: 0.0.40
codegen_flags: <defaults>
</compile_context>

<pallas_src>
import functools

import jax
import jax.numpy as jnp
from jax import lax
from jax.experimental import pallas as pl
from jax.experimental.pallas import tpu as pltpu

MEAN = (0.485, 0.456, 0.406)
STD = (0.229, 0.224, 0.225)


# --------------------------------------------------------------------------
# VMEM-aware tile sizing
# --------------------------------------------------------------------------
def _vmem_capacity_bytes():
    try:
        return int(pltpu.get_tpu_info().vmem_capacity_bytes)
    except Exception:
        return 64 * 1024 * 1024  # conservative (v7x per-TC VMEM)


_VMEM_CAP = _vmem_capacity_bytes()
# Scoped-VMEM limit handed to Mosaic (raised on 128-MiB parts, capped ~100 MiB).
_VMEM_LIMIT = min(_VMEM_CAP, 100 * 1024 * 1024)
# Tile-sizing budget: leave headroom for Mosaic internals / double-buffer slack.
_VMEM_BUDGET = (_VMEM_LIMIT * 3) // 4


def _pick_tn(hw, bytes_per_hw_tn_elem, fixed_bytes, budget=None):
    """Largest lane tile TN (multiple of 128 that divides hw, or hw itself)
    whose estimated VMEM live set  hw*TN*bytes_per_hw_tn_elem + fixed_bytes
    fits the budget."""
    if budget is None:
        budget = _VMEM_BUDGET
    cands = [t for t in (2048, 1024, 512, 256, 128) if t <= hw and hw % t == 0]
    if not cands:
        return hw  # tiny / irregular HW: single full-width block
    for tn in cands:
        if hw * tn * bytes_per_hw_tn_elem + fixed_bytes <= budget:
            return tn
    return cands[-1]


# --------------------------------------------------------------------------
# Preprocess:  (x + 1)/2  then per-channel (x - mean)/std, fused as x*s + b.
# Left to XLA fusion (under jit) per review: a dedicated pallas_call only adds
# a launch + padded (8,128) tiles for a 6-row array.
# --------------------------------------------------------------------------
def preprocess_normalize(x):
    mean = jnp.asarray(MEAN, jnp.float32).reshape(1, 3, 1, 1)
    std = jnp.asarray(STD, jnp.float32).reshape(1, 3, 1, 1)
    scale = 0.5 / std
    bias = (0.5 - mean) / std
    return x.astype(jnp.float32) * scale + bias


# --------------------------------------------------------------------------
# Kernel 1: NLM_woSoft affinity + temperature softmax over dim=1 (rows),
# tiled over affinity columns (lane axis).  The softmax reduction is fully
# contained in each (HW, TN) column tile.  Output stored as bf16.
#   aff[b]      = Fgray1[b].T @ Fgray2[b]          (HW, HW)
#   aff_norm[b] = softmax(aff[b] * temp, axis=0)   (softmax over torch dim=1)
# --------------------------------------------------------------------------
def _affinity_softmax_kernel(f1_ref, f2_ref, affn_ref, *, temp):
    f1 = f1_ref[0]                        # (C, HW)  full rows, f32
    f2 = f2_ref[0] * temp                 # (C, TN)  temp folded into small operand
    s = lax.dot_general(
        f1, f2,
        dimension_numbers=(((0,), (0,)), ((), ())),
        preferred_element_type=jnp.float32,
    )                                     # (HW, TN) f32
    m = jnp.max(s, axis=0, keepdims=True)
    e = jnp.exp(s - m)
    denom = jnp.sum(e, axis=0, keepdims=True)
    affn_ref[0] = (e * pl.reciprocal(denom, approx=True)).astype(affn_ref.dtype)


def nlm_affinity_softmax(f1, f2, temp, out_dtype=jnp.bfloat16):
    b, c, h, w = f1.shape
    hw = h * w
    f1f = f1.reshape(b, c, hw)
    f2f = f2.reshape(b, c, hw)
    out_bytes = jnp.dtype(out_dtype).itemsize
    # live set per tile: s + e (f32) + double-buffered output tile,
    # plus the (C, HW)/(C, TN) operands (double-buffered).
    tn = _pick_tn(hw, 8 + 2 * out_bytes, 4 * c * hw * 4)
    kernel = functools.partial(_affinity_softmax_kernel, temp=float(temp))
    return pl.pallas_call(
        kernel,
        out_shape=jax.ShapeDtypeStruct((b, hw, hw), out_dtype),
        grid=(b, hw // tn),
        in_specs=[
            pl.BlockSpec((1, c, hw), lambda i, j: (i, 0, 0)),
            pl.BlockSpec((1, c, tn), lambda i, j: (i, 0, j)),
        ],
        out_specs=pl.BlockSpec((1, hw, tn), lambda i, j: (i, 0, j)),
        compiler_params=pltpu.CompilerParams(
            dimension_semantics=("parallel", "parallel"),
            vmem_limit_bytes=_VMEM_LIMIT,
        ),
    )(f1f, f2f)


# --------------------------------------------------------------------------
# Kernel 2: transform(aff, frame1) = bmm(frame1.view(b,c,hw), aff)
# (colour-branch op), tiled over aff columns; accepts bf16 aff.
# --------------------------------------------------------------------------
def _transform_kernel(f_ref, a_ref, o_ref):
    a = a_ref[0].astype(jnp.float32)      # (HW, TN)
    o_ref[0] = jnp.dot(f_ref[0], a, preferred_element_type=jnp.float32)


def transform_pallas(aff, frame1):
    b, c, h, w = frame1.shape
    hw = h * w
    f = frame1.reshape(b, c, hw).astype(jnp.float32)
    aff_bytes = jnp.dtype(aff.dtype).itemsize
    # live set: double-buffered aff tile + f32 cast of the tile + small rest.
    tn = _pick_tn(hw, 2 * aff_bytes + 4, 4 * c * hw * 4)
    out = pl.pallas_call(
        _transform_kernel,
        out_shape=jax.ShapeDtypeStruct((b, c, hw), jnp.float32),
        grid=(b, hw // tn),
        in_specs=[
            pl.BlockSpec((1, c, hw), lambda i, j: (i, 0, 0)),
            pl.BlockSpec((1, hw, tn), lambda i, j: (i, 0, j)),
        ],
        out_specs=pl.BlockSpec((1, c, tn), lambda i, j: (i, 0, j)),
        compiler_params=pltpu.CompilerParams(
            dimension_semantics=("parallel", "parallel"),
            vmem_limit_bytes=_VMEM_LIMIT,
        ),
    )(f, aff)
    return out.reshape(b, c, h, w)


# --------------------------------------------------------------------------
# Kernel 3 (fused, colour path): transform(softmax(F1^T F2 * temp, dim=1), frame)
# computed per column tile without ever materializing aff / aff_norm in HBM:
#   e = exp(s - max), denom = sum(e, axis=0), out = (frame @ e) * 1/denom.
# Exact fusion: the softmax reduction axis == the bmm contraction axis, fully
# inside each tile.
# --------------------------------------------------------------------------
def _fused_softmax_transform_kernel(f1_ref, f2_ref, fr_ref, o_ref, *, temp):
    f1 = f1_ref[0]                        # (C, HW)
    f2 = f2_ref[0] * temp                 # (C, TN)
    fr = fr_ref[0]                        # (Cc, HW)
    s = lax.dot_general(
        f1, f2,
        dimension_numbers=(((0,), (0,)), ((), ())),
        preferred_element_type=jnp.float32,
    )                                     # (HW, TN)
    m = jnp.max(s, axis=0, keepdims=True)
    e = jnp.exp(s - m)
    denom = jnp.sum(e, axis=0, keepdims=True)
    num = jnp.dot(fr, e, preferred_element_type=jnp.float32)   # (Cc, TN)
    o_ref[0] = num * pl.reciprocal(denom, approx=True)


def transform_fused(fgray1, fgray2, frame1, temp):
    b, c, h, w = fgray1.shape
    cc = frame1.shape[1]
    hw = h * w
    f1f = fgray1.reshape(b, c, hw)
    f2f = fgray2.reshape(b, c, hw)
    frf = frame1.reshape(b, cc, hw).astype(jnp.float32)
    # live set: s + e (f32) dominate; operands (C,HW)/(Cc,HW) are small.
    tn = _pick_tn(hw, 8, (4 * c + 4 * cc) * hw * 4)
    kernel = functools.partial(_fused_softmax_transform_kernel, temp=float(temp))
    out = pl.pallas_call(
        kernel,
        out_shape=jax.ShapeDtypeStruct((b, cc, hw), jnp.float32),
        grid=(b, hw // tn),
        in_specs=[
            pl.BlockSpec((1, c, hw), lambda i, j: (i, 0, 0)),
            pl.BlockSpec((1, c, tn), lambda i, j: (i, 0, j)),
            pl.BlockSpec((1, cc, hw), lambda i, j: (i, 0, 0)),
        ],
        out_specs=pl.BlockSpec((1, cc, tn), lambda i, j: (i, 0, j)),
        compiler_params=pltpu.CompilerParams(
            dimension_semantics=("parallel", "parallel"),
            vmem_limit_bytes=_VMEM_LIMIT,
        ),
    )(f1f, f2f, frf)
    return out.reshape(b, cc, h, w)


# --------------------------------------------------------------------------
# Model wrapper (forward semantics of Model_switchGTfixdot_swCC_Res)
# --------------------------------------------------------------------------
class ModelSwitchGTfixdotSwCCRes:
    def __init__(self, temp=1.0, aff_dtype=jnp.bfloat16):
        self.temp = float(temp)
        self.aff_dtype = aff_dtype
        self._fwd = jax.jit(self._forward_no_color)

    def _forward_no_color(self, gray1, gray2):
        g1 = preprocess_normalize(gray1)
        g2 = preprocess_normalize(gray2)
        # TODO(synk): gray_encoder (ResNet-18) is not defined in the provided source;
        # it is treated as identity, so Fgray == normalized gray (C=3).
        Fgray1, Fgray2 = g1, g2
        aff_norm = nlm_affinity_softmax(Fgray1, Fgray2, self.temp,
                                        out_dtype=self.aff_dtype)
        return aff_norm, Fgray1, Fgray2

    def __call__(self, gray1, gray2, color1=None, color2=None):
        if color1 is None:
            return self._fwd(gray1, gray2)
        # TODO(synk): rgb_encoder (encoder3) / decoder3 are not defined in the provided
        # source; the colour branch (pred1/pred2) is therefore not implemented.
        # transform_fused / transform_pallas above cover the `transform` op it needs.
        raise NotImplementedError("rgb_encoder / decoder are not defined in the source")


# --------------------------------------------------------------------------
if __name__ == "__main__":
    key = jax.random.PRNGKey(0)
    k1, k2 = jax.random.split(key)
    B, C, H, W = 2, 3, 16, 16
    gray1 = jax.random.uniform(k1, (B, C, H, W), jnp.float32, minval=-1.0, maxval=1.0)
    gray2 = jax.random.uniform(k2, (B, C, H, W), jnp.float32, minval=-1.0, maxval=1.0)

    temp = 1.0
    model = ModelSwitchGTfixdotSwCCRes(temp=temp)
    aff_norm, Fgray1, Fgray2 = model(gray1, gray2)
    jax.block_until_ready((aff_norm, Fgray1, Fgray2))

    # ---- pure-JAX reference -------------------------------------------------
    def ref_norm(x):
        mean = jnp.asarray(MEAN, jnp.float32).reshape(1, 3, 1, 1)
        std = jnp.asarray(STD, jnp.float32).reshape(1, 3, 1, 1)
        return ((x + 1.0) / 2.0 - mean) / std

    F1r, F2r = ref_norm(gray1), ref_norm(gray2)
    a_ref = jnp.einsum(
        "bci,bcj->bij",
        F1r.reshape(B, C, -1), F2r.reshape(B, C, -1),
        precision=lax.Precision.HIGHEST,
    )
    an_ref = jax.nn.softmax(a_ref * temp, axis=1)

    assert jnp.allclose(Fgray1, F1r, atol=1e-5, rtol=1e-5)
    assert jnp.allclose(Fgray2, F2r, atol=1e-5, rtol=1e-5)
    # aff_norm is stored as bf16 (HBM-traffic optimisation) -> loose tolerance.
    assert jnp.allclose(aff_norm.astype(jnp.float32), an_ref, atol=4e-3, rtol=3e-2)

    # Standalone transform kernel (colour-branch op) on the bf16 affinity.
    est = transform_pallas(aff_norm, Fgray1)
    jax.block_until_ready(est)
    est_ref = jnp.einsum(
        "bcj,bjk->bck",
        F1r.reshape(B, C, -1), an_ref,
        precision=lax.Precision.HIGHEST,
    ).reshape(B, C, H, W)
    assert est.shape == (B, C, H, W)
    assert jnp.allclose(est, est_ref, atol=2e-2, rtol=2e-2)

    # Fused softmax + transform (never materializes aff_norm in HBM).
    est_fused = transform_fused(Fgray1, Fgray2, Fgray1, temp)
    jax.block_until_ready(est_fused)
    assert est_fused.shape == (B, C, H, W)
    assert jnp.allclose(est_fused, est_ref, atol=1e-2, rtol=1e-2)

    print("KERNEL_OK")
</pallas_src>

<mosaic_0001>
module attributes {stable_mosaic.version = 11 : i64} {
  func.func @_affinity_softmax_kernel(%arg0: i32, %arg1: i32, %arg2: memref<1x3x256xf32, #tpu.memory_space<vmem>>, %arg3: memref<1x3x256xf32, #tpu.memory_space<vmem>>, %arg4: memref<1x256x256xbf16, #tpu.memory_space<vmem>>) attributes {dimension_semantics = [#tpu.dimension_semantics<parallel>, #tpu.dimension_semantics<parallel>], iteration_bounds = array<i64: 2, 1>, scalar_prefetch = 0 : i64, scratch_operands = 0 : i64, tpu.core_type = #tpu.core_type<tc>, window_params = [{transform_indices = @transform_0, window_bounds = array<i64: 1, 3, 256>}, {transform_indices = @transform_1, window_bounds = array<i64: 1, 3, 256>}, {transform_indices = @transform_2, window_bounds = array<i64: 1, 256, 256>}]} {
    %c0 = arith.constant 0 : index
    %c0_0 = arith.constant 0 : index
    %c0_1 = arith.constant 0 : index
    %0 = vector.load %arg2[%c0, %c0_0, %c0_1] : memref<1x3x256xf32, #tpu.memory_space<vmem>>, vector<1x3x256xf32>
    %1 = vector.shape_cast %0 : vector<1x3x256xf32> to vector<3x256xf32>
    %c0_2 = arith.constant 0 : index
    %c0_3 = arith.constant 0 : index
    %c0_4 = arith.constant 0 : index
    %2 = vector.load %arg3[%c0_2, %c0_3, %c0_4] : memref<1x3x256xf32, #tpu.memory_space<vmem>>, vector<1x3x256xf32>
    %3 = vector.shape_cast %2 : vector<1x3x256xf32> to vector<3x256xf32>
    %cst = arith.constant 1.000000e+00 : f32
    %4 = vector.broadcast %cst : f32 to vector<3x256xf32>
    %5 = arith.mulf %3, %4 : vector<3x256xf32>
    %cst_5 = arith.constant dense<0.000000e+00> : vector<256x256xf32>
    %6 = tpu.matmul %1, %5, %cst_5 {dimension_numbers = #tpu.dot_dimension_numbers<[0], [0], [1], [1], [0, 1, 1, 1], [], []>} : vector<3x256xf32>, vector<3x256xf32>, vector<256x256xf32> -> vector<256x256xf32>
    %cst_6 = arith.constant dense<0xFF800000> : vector<256xf32>
    %7 = vector.multi_reduction <maximumf>, %6, %cst_6 [0] : vector<256x256xf32> to vector<256xf32>
    %8 = vector.shape_cast %7 : vector<256xf32> to vector<1x256xf32>
    %9 = vector.broadcast %8 : vector<1x256xf32> to vector<256x256xf32>
    %10 = arith.subf %6, %9 : vector<256x256xf32>
    %11 = math.exp %10 : vector<256x256xf32>
    %cst_7 = arith.constant dense<0.000000e+00> : vector<256xf32>
    %12 = vector.multi_reduction <add>, %11, %cst_7 [0] : vector<256x256xf32> to vector<256xf32>
    %13 = vector.shape_cast %12 : vector<256xf32> to vector<1x256xf32>
    %14 = tpu.reciprocal %13 {approx = true} : vector<1x256xf32> -> vector<1x256xf32>
    %15 = vector.broadcast %14 : vector<1x256xf32> to vector<256x256xf32>
    %16 = arith.mulf %11, %15 : vector<256x256xf32>
    %17 = arith.truncf %16 : vector<256x256xf32> to vector<256x256xbf16>
    %c0_8 = arith.constant 0 : index
    %c0_9 = arith.constant 0 : index
    %c0_10 = arith.constant 0 : index
    %18 = vector.load %arg4[%c0_8, %c0_9, %c0_10] : memref<1x256x256xbf16, #tpu.memory_space<vmem>>, vector<1x256x256xbf16>
    %19 = vector.shape_cast %18 : vector<1x256x256xbf16> to vector<256x256xbf16>
    %20 = vector.shape_cast %17 : vector<256x256xbf16> to vector<1x256x256xbf16>
    tpu.vector_store %arg4[%c0_8, %c0_9, %c0_10], %20 {strides = array<i32>} : memref<1x256x256xbf16, #tpu.memory_space<vmem>>, vector<1x256x256xbf16>,
    return
  }
  func.func @transform_0(%arg0: i32, %arg1: i32) -> (i32, i32, i32) {
    %c0_i32 = arith.constant 0 : i32
    %c0_i32_0 = arith.constant 0 : i32
    %c0_i32_1 = arith.constant 0 : i32
    return %arg0, %c0_i32, %c0_i32_0 : i32, i32, i32
  }
  func.func @transform_1(%arg0: i32, %arg1: i32) -> (i32, i32, i32) {
    %c0_i32 = arith.constant 0 : i32
    %c0_i32_0 = arith.constant 0 : i32
    return %arg0, %c0_i32, %arg1 : i32, i32, i32
  }
  func.func @transform_2(%arg0: i32, %arg1: i32) -> (i32, i32, i32) {
    %c0_i32 = arith.constant 0 : i32
    %c0_i32_0 = arith.constant 0 : i32
    return %arg0, %c0_i32, %arg1 : i32, i32, i32
  }
}

</mosaic_0001>

<llo_original>
// kernel: _forward_no_color.1
$region0: #{_forward_no_color.1}
  #allocation0 [shape = 'u32[]', space=smem, size = 0x4, offset = 0x4, fixed_abs, tag = 'smem constant byte address 0x4 - core index']
  #allocation1 [shape = 'u32[72,128]{1,0:T(1,128)}', space=vmem, size = 0x9000, scoped, tag = 'internal scratch']
  %s0 = inlined_call_operand.vmem [shape: f32[2,3,256], index: 0, kind: input, shape index: {}]
  %s1 = inlined_call_operand.vmem [shape: f32[2,3,256], index: 1, kind: input, shape index: {}]
  %s2 = inlined_call_operand.hbm [shape: bf16[2,256,256], index: 2, kind: output, shape index: {}]
  %s3 = sld [smem:[#allocation0]]
  $region41: #{_forward_no_color.1} parent=0
    _
  %s5 = ssub.s32 1, %s3
  %s6 = scalar_select 0, %s5, %s3
  $region1: #{_forward_no_color.1} parent=0
    #allocation2 [shape = 'u8[262144]{0}', space=vmem, size = 0x40000, scoped, tag = 'output window, operand 0']
    #allocation3 [shape = 's32[2]{0}', space=sflag, size = 0x8, scoped, tag = 'scoped memory for _forward_no_color.1']
    %7 = vsyncpa [#allocation3], 0
    %s8 = scalar_lea.sflag [#allocation3], 1
    %9 = vsyncpa %s8, 0
    loop: start=0, step=1, limit=4
    $region2: #{_forward_no_color.1} parent=1 // loop_pre_header
      _
    $region3: #{_forward_no_color.1} parent=1 // loop_header
      %s11 = sphi 0, %s15
      %p12 = scmp.ge.s32.totalorder %s11, 4
      %s18 = sphi 0, %s30
      %s19 = sphi 0, %s26
      %s20 = sphi 0, %s18
      %s21 = sphi 0, %s19
      %s22 = sphi 0, %s20
      %s23 = sphi 0, %s21
      %s33 = sphi 0, %s35
      %s36 = sphi 0, %s33
      %s37 = sphi 0, %s36
      %s53 = sphi 0, %s37
      %s61 = sphi 0, %s63
      %s64 = sphi 0, %s61
      %s65 = sphi 0, %s64
      %s81 = sphi 0, %s65
      %s89 = sphi 0, %s91
      %s92 = sphi 0, %s89
      %s93 = sphi 0, %s92
      %s109 = sphi 0, %s93
    $region4: #{_forward_no_color.1} parent=1 // loop_header_branch
      %14 = sbr.rel (%p12) target = $region8
    $region5: #{_forward_no_color.1} parent=1 // loop_body
      %s16 = ssub.s32 %s11, 1
      %s17 = ssub.s32 %s11, 2
      %s24 = sadd.s32 1, %s19
      %p25 = scmp.ge.s32.totalorder %s24, 1
      %s26 = scalar_select %p25, 0, %s24
      %s27 = sadd.s32 1, %s18
      %s28 = scalar_select %p25, %s27, %s18
      %p29 = scmp.ge.s32.totalorder %s28, 2
      %s30 = scalar_select %p29, 0, %s28
      %s31 = ssub.s32 %s18, %s30
      %p32 = scmp.eq.s32.totalorder %s31, 0
      %s34 = sadd.s32 %s33, 1
      %s35 = scalar_select %p32, %s33, %s34
      %p38 = pneg %p32
      %p39 = scmp.eq.s32.totalorder %s11, 1
      %p40 = por %p38, %p39
      %p41 = scmp.ne.s32.totalorder %s33, %s36
      %p42 = scmp.eq.s32.totalorder %s11, 0
      %p43 = por %p41, %p42
      %p44 = scmp.ne.s32.totalorder %s33, %s36
      %p45 = scmp.eq.s32.totalorder %s16, 1
      %p46 = por %p44, %p45
      %p47 = scmp.ne.s32.totalorder %s36, %s37
      %p48 = scmp.eq.s32.totalorder %s16, 0
      %p49 = por %p47, %p48
      %p50 = scmp.ne.s32.totalorder %s36, %s37
      %p51 = scmp.eq.s32.totalorder %s17, 1
      %p52 = por %p50, %p51
      %p54 = scmp.ne.s32.totalorder %s37, %s53
      %p55 = scmp.eq.s32.totalorder %s17, 0
      %p56 = por %p54, %p55
      %s57 = ssub.s32 %s18, %s30
      %s58 = ssub.s32 %s19, %s26
      %s59 = sor.u32 %s57, %s58
      %p60 = scmp.eq.s32.totalorder %s59, 0
      %s62 = sadd.s32 %s61, 1
      %s63 = scalar_select %p60, %s61, %s62
      %p66 = pneg %p60
      %p67 = scmp.eq.s32.totalorder %s11, 1
      %p68 = por %p66, %p67
      %p69 = scmp.ne.s32.totalorder %s61, %s64
      %p70 = scmp.eq.s32.totalorder %s11, 0
      %p71 = por %p69, %p70
      %p72 = scmp.ne.s32.totalorder %s61, %s64
      %p73 = scmp.eq.s32.totalorder %s16, 1
      %p74 = por %p72, %p73
      %p75 = scmp.ne.s32.totalorder %s64, %s65
      %p76 = scmp.eq.s32.totalorder %s16, 0
      %p77 = por %p75, %p76
      %p78 = scmp.ne.s32.totalorder %s64, %s65
      %p79 = scmp.eq.s32.totalorder %s17, 1
      %p80 = por %p78, %p79
      %p82 = scmp.ne.s32.totalorder %s65, %s81
      %p83 = scmp.eq.s32.totalorder %s17, 0
      %p84 = por %p82, %p83
      %s85 = ssub.s32 %s18, %s30
      %s86 = ssub.s32 %s19, %s26
      %s87 = sor.u32 %s85, %s86
      %p88 = scmp.eq.s32.totalorder %s87, 0
      %s90 = sadd.s32 %s89, 1
      %s91 = scalar_select %p88, %s89, %s90
      %p94 = pneg %p88
      %p95 = scmp.eq.s32.totalorder %s11, 1
      %p96 = por %p94, %p95
      %p97 = scmp.ne.s32.totalorder %s89, %s92
      %p98 = scmp.eq.s32.totalorder %s11, 0
      %p99 = por %p97, %p98
      %p100 = scmp.ne.s32.totalorder %s89, %s92
      %p101 = scmp.eq.s32.totalorder %s16, 1
      %p102 = por %p100, %p101
      %p103 = scmp.ne.s32.totalorder %s92, %s93
      %p104 = scmp.eq.s32.totalorder %s16, 0
      %p105 = por %p103, %p104
      %p106 = scmp.ne.s32.totalorder %s92, %s93
      %p107 = scmp.eq.s32.totalorder %s17, 1
      %p108 = por %p106, %p107
      %p110 = scmp.ne.s32.totalorder %s93, %s109
      %p111 = scmp.eq.s32.totalorder %s17, 0
      %p112 = por %p110, %p111
      %p113 = scmp.le.s32.totalorder 1, %s11
      %p114 = scmp.lt.s32.totalorder %s11, 3
      %p115 = pnand %p113, %p114
      %p116 = pneg %p115
      // Predicated region
      $region9: #{_forward_no_color.1} parent=5 // pred_check
        _
      $region10: #{_forward_no_color.1} parent=5 // pred_check_branch
        %118 = sbr.rel (%p115) target = $region12
      $region11: #{_forward_no_color.1} parent=5 // pred_region
        %s119 = ssub.s32 %s11, 1
      $region12: #{_forward_no_color.1} parent=5 // pred_fallthru
        _
      %p120 = scmp.lt.s32.totalorder %s11, 2
      // Predicated region
      $region13: #{_forward_no_color.1} parent=5 // pred_check
        %p121 = pneg %p120
      $region14: #{_forward_no_color.1} parent=5 // pred_check_branch
        %123 = sbr.rel (%p121) target = $region16
      $region15: #{_forward_no_color.1} parent=5 // pred_region
        // Predicated region
        $region17: #{_forward_no_color.1} parent=15 // pred_check
          %p124 = pneg %p43
        $region18: #{_forward_no_color.1} parent=15 // pred_check_branch
          %126 = sbr.rel (%p124) target = $region20
        $region19: #{_forward_no_color.1} parent=15 // pred_region
          %p127 = scmp.lt.s32.totalorder %s18, 1
          %s128 = scalar_select %p127, %s18, 1
          %s129 = smul.addr %s128, 2
          %s130 = smul.addr %s129, 4
          %s131 = scalar_lea.vmem %s0, %s130
        $region20: #{_forward_no_color.1} parent=15 // pred_fallthru
          _
        // Predicated region
        $region21: #{_forward_no_color.1} parent=15 // pred_check
          %p132 = pneg %p71
        $region22: #{_forward_no_color.1} parent=15 // pred_check_branch
          %134 = sbr.rel (%p132) target = $region24
        $region23: #{_forward_no_color.1} parent=15 // pred_region
          %s135 = smul.u32 2, %s19
          %p136 = scmp.lt.s32.totalorder %s18, 1
          %s137 = scalar_select %p136, %s18, 1
          %p138 = scmp.lt.s32.totalorder %s135, 1
          %s139 = scalar_select %p138, %s135, 1
          %s140 = smul.addr %s137, 2
          %s141 = sadd.s32 %s139, %s140
          %s142 = smul.addr %s141, 4
          %s143 = scalar_lea.vmem %s1, %s142
          %s144 = smul.u32 2, %s19
        $region24: #{_forward_no_color.1} parent=15 // pred_fallthru
          _
      $region16: #{_forward_no_color.1} parent=5 // pred_fallthru
        _
      %p145 = scmp.le.s32.totalorder 1, %s11
      %p146 = scmp.lt.s32.totalorder %s11, 3
      %p147 = pnand %p145, %p146
      %p148 = pneg %p147
      // Predicated region
      $region25: #{_forward_no_color.1} parent=5 // pred_check
        _
      $region26: #{_forward_no_color.1} parent=5 // pred_check_branch
        %150 = sbr.rel (%p147) target = $region28
      $region27: #{_forward_no_color.1} parent=5 // pred_region
        %s151 = ssub.s32 %s11, 1
        %p152 = scmp.lt.s32.totalorder %s20, 1
        %s153 = scalar_select %p152, %s20, 1
        %s154 = smul.addr %s153, 2
        %s155 = smul.addr %s154, 4
        %s156 = scalar_lea.vmem %s0, %s155
        %p157 = pneg %p49
        %p158 = pneg %p46
        %s159 = smul.u32 2, %s21
        %p160 = scmp.lt.s32.totalorder %s20, 1
        %s161 = scalar_select %p160, %s20, 1
        %p162 = scmp.lt.s32.totalorder %s159, 1
        %s163 = scalar_select %p162, %s159, 1
        %s164 = smul.addr %s161, 2
        %s165 = sadd.s32 %s163, %s164
        %s166 = smul.addr %s165, 4
        %s167 = scalar_lea.vmem %s1, %s166
        %p168 = pneg %p77
        %p169 = pneg %p74
        %p170 = pneg %p105
        %p171 = pneg %p102
        %s172 = sand.u32 %s92, 1
        %s173 = scalar_lea.sflag [#allocation3], %s172
        %s174 = sand.u32 %s92, 1
        %s175 = smul.addr %s174, 256
        %s176 = scalar_lea.vmem [#allocation2], %s175
        %p177 = scmp.lt.s32.totalorder %s20, 1
        %s178 = scalar_select %p177, %s20, 1
        %s179 = smul.addr %s178, 2
        %s180 = smul.addr %s179, 4
        %s181 = scalar_lea.vmem %s0, %s180
        %s182 = smul.u32 2, %s21
        %p183 = scmp.lt.s32.totalorder %s20, 1
        %s184 = scalar_select %p183, %s20, 1
        %p185 = scmp.lt.s32.totalorder %s182, 1
        %s186 = scalar_select %p185, %s182, 1
        %s187 = smul.addr %s184, 2
        %s188 = sadd.s32 %s186, %s187
        %s189 = smul.addr %s188, 4
        %s190 = scalar_lea.vmem %s1, %s189
        %s191 = smul.u32 2, %s21
        %s192 = smul.u32 2, %s21
        %v193 = vld [vmem:[%s181] sm:$0x77]
        %v194 = vld [vmem:[%s190] sm:$0x77]
        %196 = vst [vmem:[#allocation1] ss:$2 sm:$0xff] %v193
        %v197 = vld.sshfl [vmem:[#allocation1] sm:$0xff pattern:$0x75316420]
        %v198 = vld.sshfl [vmem:[#allocation1 + $0x8] sm:$0xff pattern:$0x75316420]
        %201 = vxpose.xlu0.b32.start [1/16] %v197, 128
        %202 = vxpose.xlu0.b32.cont [2/16] 0.0, 128
        %203 = vxpose.xlu0.b32.cont [3/16] 0.0, 128
        %204 = vxpose.xlu0.b32.cont [4/16] 0.0, 128
        %205 = vxpose.xlu0.b32.cont [5/16] 0.0, 128
        %206 = vxpose.xlu0.b32.cont [6/16] 0.0, 128
        %207 = vxpose.xlu0.b32.cont [7/16] 0.0, 128
        %208 = vxpose.xlu0.b32.cont [8/16] 0.0, 128
        %209 = vxpose.xlu0.b32.cont [9/16] 0.0, 128
        %210 = vxpose.xlu0.b32.cont [10/16] 0.0, 128
        %211 = vxpose.xlu0.b32.cont [11/16] 0.0, 128
        %212 = vxpose.xlu0.b32.cont [12/16] 0.0, 128
        %213 = vxpose.xlu0.b32.cont [13/16] 0.0, 128
        %214 = vxpose.xlu0.b32.cont [14/16] 0.0, 128
        %215 = vxpose.xlu0.b32.cont [15/16] 0.0, 128
        %216 = vxpose.xlu0.b32.end [16/16] 0.0, 128
        %v217 = vpop.trf.xlu0
        %v218 = vpop.trf.xlu0
        %v219 = vpop.trf.xlu0
        %v220 = vpop.trf.xlu0
        %v221 = vpop.trf.xlu0
        %v222 = vpop.trf.xlu0
        %v223 = vpop.trf.xlu0
        %v224 = vpop.trf.xlu0
        %v225 = vpop.trf.xlu0
        %v226 = vpop.trf.xlu0
        %v227 = vpop.trf.xlu0
        %v228 = vpop.trf.xlu0
        %v229 = vpop.trf.xlu0
        %v230 = vpop.trf.xlu0
        %v231 = vpop.trf.xlu0
        %v232 = vpop.trf.xlu0
        %233 = vxpose.xlu0.b32.start [1/16] %v198, 128
        %234 = vxpose.xlu0.b32.cont [2/16] 0.0, 128
        %235 = vxpose.xlu0.b32.cont [3/16] 0.0, 128
        %236 = vxpose.xlu0.b32.cont [4/16] 0.0, 128
        %237 = vxpose.xlu0.b32.cont [5/16] 0.0, 128
        %238 = vxpose.xlu0.b32.cont [6/16] 0.0, 128
        %239 = vxpose.xlu0.b32.cont [7/16] 0.0, 128
        %240 = vxpose.xlu0.b32.cont [8/16] 0.0, 128
        %241 = vxpose.xlu0.b32.cont [9/16] 0.0, 128
        %242 = vxpose.xlu0.b32.cont [10/16] 0.0, 128
        %243 = vxpose.xlu0.b32.cont [11/16] 0.0, 128
        %244 = vxpose.xlu0.b32.cont [12/16] 0.0, 128
        %245 = vxpose.xlu0.b32.cont [13/16] 0.0, 128
        %246 = vxpose.xlu0.b32.cont [14/16] 0.0, 128
        %247 = vxpose.xlu0.b32.cont [15/16] 0.0, 128
        %248 = vxpose.xlu0.b32.end [16/16] 0.0, 128
        %v249 = vpop.trf.xlu0
        %v250 = vpop.trf.xlu0
        %v251 = vpop.trf.xlu0
        %v252 = vpop.trf.xlu0
        %v253 = vpop.trf.xlu0
        %v254 = vpop.trf.xlu0
        %v255 = vpop.trf.xlu0
        %v256 = vpop.trf.xlu0
        %v257 = vpop.trf.xlu0
        %v258 = vpop.trf.xlu0
        %v259 = vpop.trf.xlu0
        %v260 = vpop.trf.xlu0
        %v261 = vpop.trf.xlu0
        %v262 = vpop.trf.xlu0
        %v263 = vpop.trf.xlu0
        %v264 = vpop.trf.xlu0
        %266 = vst [vmem:[#allocation1] ss:$2 sm:$0xff] %v194
        %v267 = vld.sshfl [vmem:[#allocation1] sm:$0xff pattern:$0x75316420]
        %v268 = vld.sshfl [vmem:[#allocation1 + $0x8] sm:$0xff pattern:$0x75316420]
        %vm269 = vcmask 23552
        %v271 = vsel %vm269, %v217, 0
        %v274 = vsel %vm269, %v218, 0
        %v277 = vsel %vm269, %v219, 0
        %v280 = vsel %vm269, %v220, 0
        %v283 = vsel %vm269, %v221, 0
        %v286 = vsel %vm269, %v222, 0
        %v289 = vsel %vm269, %v223, 0
        %v292 = vsel %vm269, %v224, 0
        %v295 = vsel %vm269, %v225, 0
        %v298 = vsel %vm269, %v226, 0
        %v301 = vsel %vm269, %v227, 0
        %v304 = vsel %vm269, %v228, 0
        %v307 = vsel %vm269, %v229, 0
        %v310 = vsel %vm269, %v230, 0
        %v313 = vsel %vm269, %v231, 0
        %v316 = vsel %vm269, %v232, 0
        %v319 = vsel %vm269, %v249, 0
        %v322 = vsel %vm269, %v250, 0
        %v325 = vsel %vm269, %v251, 0
        %v328 = vsel %vm269, %v252, 0
        %v331 = vsel %vm269, %v253, 0
        %v334 = vsel %vm269, %v254, 0
        %v337 = vsel %vm269, %v255, 0
        %v340 = vsel %vm269, %v256, 0
        %v343 = vsel %vm269, %v257, 0
        %v346 = vsel %vm269, %v258, 0
        %v349 = vsel %vm269, %v259, 0
        %v352 = vsel %vm269, %v260, 0
        %v355 = vsel %vm269, %v261, 0
        %v358 = vsel %vm269, %v262, 0
        %v361 = vsel %vm269, %v263, 0
        %v364 = vsel %vm269, %v264, 0
        %vm366 = vcmask 1042432
        %v367 = vsel %vm366, %v267, 0
        %v369 = vsel %vm366, %v268, 0
        %371 = vmatpush.msra.mxu0 0.0
        %372 = vmatpush.msra.mxu0 0.0
        %373 = vmatpush.msra.mxu0 0.0
        %374 = vmatpush.msra.mxu0 0.0
        %375 = vmatpush.msra.mxu0 0.0
        %376 = vmatpush.msra.mxu0 0.0
        %377 = vmatpush.msra.mxu0 0.0
        %378 = vmatpush.msra.mxu0 0.0
        %379 = vmatpush.msra.mxu0 0.0
        %380 = vmatpush.msra.mxu0 0.0
        %381 = vmatpush.msra.mxu0 0.0
        %382 = vmatpush.msra.mxu0 0.0
        %383 = vmatpush.msra.mxu0 0.0
        %384 = vmatpush.msra.mxu0 0.0
        %385 = vmatpush.msra.mxu0 0.0
        %386 = vmatpush.msra.mxu0 %v367
        %387 = vmatmul.f32.gmra.mxu0 %v271
        %v388 = vpop.f32.mrf.mxu0
        %v389 = vadd.f32 0.0, %v388
        %390 = vmatmul.f32.gmra.mxu0 %v274
        %v391 = vpop.f32.mrf.mxu0
        %v392 = vadd.f32 0.0, %v391
        %393 = vmatmul.f32.gmra.mxu0 %v277
        %v394 = vpop.f32.mrf.mxu0
        %v395 = vadd.f32 0.0, %v394
        %396 = vmatmul.f32.gmra.mxu0 %v280
        %v397 = vpop.f32.mrf.mxu0
        %v398 = vadd.f32 0.0, %v397
        %399 = vmatmul.f32.gmra.mxu0 %v283
        %v400 = vpop.f32.mrf.mxu0
        %v401 = vadd.f32 0.0, %v400
        %402 = vmatmul.f32.gmra.mxu0 %v286
        %v403 = vpop.f32.mrf.mxu0
        %v404 = vadd.f32 0.0, %v403
        %405 = vmatmul.f32.gmra.mxu0 %v289
        %v406 = vpop.f32.mrf.mxu0
        %v407 = vadd.f32 0.0, %v406
        %408 = vmatmul.f32.gmra.mxu0 %v292
        %v409 = vpop.f32.mrf.mxu0
        %v410 = vadd.f32 0.0, %v409
        %411 = vmatmul.f32.gmra.mxu0 %v295
        %v412 = vpop.f32.mrf.mxu0
        %v413 = vadd.f32 0.0, %v412
        %414 = vmatmul.f32.gmra.mxu0 %v298
        %v415 = vpop.f32.mrf.mxu0
        %v416 = vadd.f32 0.0, %v415
        %417 = vmatmul.f32.gmra.mxu0 %v301
        %v418 = vpop.f32.mrf.mxu0
        %v419 = vadd.f32 0.0, %v418
        %420 = vmatmul.f32.gmra.mxu0 %v304
        %v421 = vpop.f32.mrf.mxu0
        %v422 = vadd.f32 0.0, %v421
        %423 = vmatmul.f32.gmra.mxu0 %v307
        %v424 = vpop.f32.mrf.mxu0
        %v425 = vadd.f32 0.0, %v424
        %426 = vmatmul.f32.gmra.mxu0 %v310
        %v427 = vpop.f32.mrf.mxu0
        %v428 = vadd.f32 0.0, %v427
        %429 = vmatmul.f32.gmra.mxu0 %v313
        %v430 = vpop.f32.mrf.mxu0
        %v431 = vadd.f32 0.0, %v430
        %432 = vmatmul.f32.gmra.mxu0 %v316
        %v433 = vpop.f32.mrf.mxu0
        %v434 = vadd.f32 0.0, %v433
        %435 = vmatmul.f32.gmra.mxu0 %v319
        %v436 = vpop.f32.mrf.mxu0
        %v437 = vadd.f32 0.0, %v436
        %438 = vmatmul.f32.gmra.mxu0 %v322
        %v439 = vpop.f32.mrf.mxu0
        %v440 = vadd.f32 0.0, %v439
        %441 = vmatmul.f32.gmra.mxu0 %v325
        %v442 = vpop.f32.mrf.mxu0
        %v443 = vadd.f32 0.0, %v442
        %444 = vmatmul.f32.gmra.mxu0 %v328
        %v445 = vpop.f32.mrf.mxu0
        %v446 = vadd.f32 0.0, %v445
        %447 = vmatmul.f32.gmra.mxu0 %v331
        %v448 = vpop.f32.mrf.mxu0
        %v449 = vadd.f32 0.0, %v448
        %450 = vmatmul.f32.gmra.mxu0 %v334
        %v451 = vpop.f32.mrf.mxu0
        %v452 = vadd.f32 0.0, %v451
        %453 = vmatmul.f32.gmra.mxu0 %v337
        %v454 = vpop.f32.mrf.mxu0
        %v455 = vadd.f32 0.0, %v454
        %456 = vmatmul.f32.gmra.mxu0 %v340
        %v457 = vpop.f32.mrf.mxu0
        %v458 = vadd.f32 0.0, %v457
        %459 = vmatmul.f32.gmra.mxu0 %v343
        %v460 = vpop.f32.mrf.mxu0
        %v461 = vadd.f32 0.0, %v460
        %462 = vmatmul.f32.gmra.mxu0 %v346
        %v463 = vpop.f32.mrf.mxu0
        %v464 = vadd.f32 0.0, %v463
        %465 = vmatmul.f32.gmra.mxu0 %v349
        %v466 = vpop.f32.mrf.mxu0
        %v467 = vadd.f32 0.0, %v466
        %468 = vmatmul.f32.gmra.mxu0 %v352
        %v469 = vpop.f32.mrf.mxu0
        %v470 = vadd.f32 0.0, %v469
        %471 = vmatmul.f32.gmra.mxu0 %v355
        %v472 = vpop.f32.mrf.mxu0
        %v473 = vadd.f32 0.0, %v472
        %474 = vmatmul.f32.gmra.mxu0 %v358
        %v475 = vpop.f32.mrf.mxu0
        %v476 = vadd.f32 0.0, %v475
        %477 = vmatmul.f32.gmra.mxu0 %v361
        %v478 = vpop.f32.mrf.mxu0
        %v479 = vadd.f32 0.0, %v478
        %480 = vmatmul.f32.gmra.mxu0 %v364
        %v481 = vpop.f32.mrf.mxu0
        %v482 = vadd.f32 0.0, %v481
        %483 = vdwg.mxu0
        %484 = vmatpush.msra.mxu0 0.0
        %485 = vmatpush.msra.mxu0 0.0
        %486 = vmatpush.msra.mxu0 0.0
        %487 = vmatpush.msra.mxu0 0.0
        %488 = vmatpush.msra.mxu0 0.0
        %489 = vmatpush.msra.mxu0 0.0
        %490 = vmatpush.msra.mxu0 0.0
        %491 = vmatpush.msra.mxu0 0.0
        %492 = vmatpush.msra.mxu0 0.0
        %493 = vmatpush.msra.mxu0 0.0
        %494 = vmatpush.msra.mxu0 0.0
        %495 = vmatpush.msra.mxu0 0.0
        %496 = vmatpush.msra.mxu0 0.0
        %497 = vmatpush.msra.mxu0 0.0
        %498 = vmatpush.msra.mxu0 0.0
        %499 = vmatpush.msra.mxu0 %v369
        %500 = vmatmul.f32.gmra.mxu0 %v271
        %v501 = vpop.f32.mrf.mxu0
        %v502 = vadd.f32 0.0, %v501
        %503 = vmatmul.f32.gmra.mxu0 %v274
        %v504 = vpop.f32.mrf.mxu0
        %v505 = vadd.f32 0.0, %v504
        %506 = vmatmul.f32.gmra.mxu0 %v277
        %v507 = vpop.f32.mrf.mxu0
        %v508 = vadd.f32 0.0, %v507
        %509 = vmatmul.f32.gmra.mxu0 %v280
        %v510 = vpop.f32.mrf.mxu0
        %v511 = vadd.f32 0.0, %v510
        %512 = vmatmul.f32.gmra.mxu0 %v283
        %v513 = vpop.f32.mrf.mxu0
        %v514 = vadd.f32 0.0, %v513
        %515 = vmatmul.f32.gmra.mxu0 %v286
        %v516 = vpop.f32.mrf.mxu0
        %v517 = vadd.f32 0.0, %v516
        %518 = vmatmul.f32.gmra.mxu0 %v289
        %v519 = vpop.f32.mrf.mxu0
        %v520 = vadd.f32 0.0, %v519
        %521 = vmatmul.f32.gmra.mxu0 %v292
        %v522 = vpop.f32.mrf.mxu0
        %v523 = vadd.f32 0.0, %v522
        %524 = vmatmul.f32.gmra.mxu0 %v295
        %v525 = vpop.f32.mrf.mxu0
        %v526 = vadd.f32 0.0, %v525
        %527 = vmatmul.f32.gmra.mxu0 %v298
        %v528 = vpop.f32.mrf.mxu0
        %v529 = vadd.f32 0.0, %v528
        %530 = vmatmul.f32.gmra.mxu0 %v301
        %v531 = vpop.f32.mrf.mxu0
        %v532 = vadd.f32 0.0, %v531
        %533 = vmatmul.f32.gmra.mxu0 %v304
        %v534 = vpop.f32.mrf.mxu0
        %v535 = vadd.f32 0.0, %v534
        %536 = vmatmul.f32.gmra.mxu0 %v307
        %v537 = vpop.f32.mrf.mxu0
        %v538 = vadd.f32 0.0, %v537
        %539 = vmatmul.f32.gmra.mxu0 %v310
        %v540 = vpop.f32.mrf.mxu0
        %v541 = vadd.f32 0.0, %v540
        %542 = vmatmul.f32.gmra.mxu0 %v313
        %v543 = vpop.f32.mrf.mxu0
        %v544 = vadd.f32 0.0, %v543
        %545 = vmatmul.f32.gmra.mxu0 %v316
        %v546 = vpop.f32.mrf.mxu0
        %v547 = vadd.f32 0.0, %v546
        %548 = vmatmul.f32.gmra.mxu0 %v319
        %v549 = vpop.f32.mrf.mxu0
        %v550 = vadd.f32 0.0, %v549
        %551 = vmatmul.f32.gmra.mxu0 %v322
        %v552 = vpop.f32.mrf.mxu0
        %v553 = vadd.f32 0.0, %v552
        %554 = vmatmul.f32.gmra.mxu0 %v325
        %v555 = vpop.f32.mrf.mxu0
        %v556 = vadd.f32 0.0, %v555
        %557 = vmatmul.f32.gmra.mxu0 %v328
        %v558 = vpop.f32.mrf.mxu0
        %v559 = vadd.f32 0.0, %v558
        %560 = vmatmul.f32.gmra.mxu0 %v331
        %v561 = vpop.f32.mrf.mxu0
        %v562 = vadd.f32 0.0, %v561
        %563 = vmatmul.f32.gmra.mxu0 %v334
        %v564 = vpop.f32.mrf.mxu0
        %v565 = vadd.f32 0.0, %v564
        %566 = vmatmul.f32.gmra.mxu0 %v337
        %v567 = vpop.f32.mrf.mxu0
        %v568 = vadd.f32 0.0, %v567
        %569 = vmatmul.f32.gmra.mxu0 %v340
        %v570 = vpop.f32.mrf.mxu0
        %v571 = vadd.f32 0.0, %v570
        %572 = vmatmul.f32.gmra.mxu0 %v343
        %v573 = vpop.f32.mrf.mxu0
        %v574 = vadd.f32 0.0, %v573
        %575 = vmatmul.f32.gmra.mxu0 %v346
        %v576 = vpop.f32.mrf.mxu0
        %v577 = vadd.f32 0.0, %v576
        %578 = vmatmul.f32.gmra.mxu0 %v349
        %v579 = vpop.f32.mrf.mxu0
        %v580 = vadd.f32 0.0, %v579
        %581 = vmatmul.f32.gmra.mxu0 %v352
        %v582 = vpop.f32.mrf.mxu0
        %v583 = vadd.f32 0.0, %v582
        %584 = vmatmul.f32.gmra.mxu0 %v355
        %v585 = vpop.f32.mrf.mxu0
        %v586 = vadd.f32 0.0, %v585
        %587 = vmatmul.f32.gmra.mxu0 %v358
        %v588 = vpop.f32.mrf.mxu0
        %v589 = vadd.f32 0.0, %v588
        %590 = vmatmul.f32.gmra.mxu0 %v361
        %v591 = vpop.f32.mrf.mxu0
        %v592 = vadd.f32 0.0, %v591
        %593 = vmatmul.f32.gmra.mxu0 %v364
        %v594 = vpop.f32.mrf.mxu0
        %v595 = vadd.f32 0.0, %v594
        %596 = vdwg.mxu0
        %v597 = vmax.f32 %v389, %v395
        %v598 = vmax.f32 %v392, %v398
        %v599 = vmax.f32 %v597, %v401
        %v600 = vmax.f32 %v598, %v404
        %v601 = vmax.f32 %v599, %v407
        %v602 = vmax.f32 %v600, %v410
        %v603 = vmax.f32 %v601, %v413
        %v604 = vmax.f32 %v602, %v416
        %v605 = vmax.f32 %v603, %v419
        %v606 = vmax.f32 %v604, %v422
        %v607 = vmax.f32 %v605, %v425
        %v608 = vmax.f32 %v606, %v428
        %v609 = vmax.f32 %v607, %v431
        %v610 = vmax.f32 %v608, %v434
        %v611 = vmax.f32 %v609, %v437
        %v612 = vmax.f32 %v610, %v440
        %v613 = vmax.f32 %v611, %v443
        %v614 = vmax.f32 %v612, %v446
        %v615 = vmax.f32 %v613, %v449
        %v616 = vmax.f32 %v614, %v452
        %v617 = vmax.f32 %v615, %v455
        %v618 = vmax.f32 %v616, %v458
        %v619 = vmax.f32 %v617, %v461
        %v620 = vmax.f32 %v618, %v464
        %v621 = vmax.f32 %v619, %v467
        %v622 = vmax.f32 %v620, %v470
        %v623 = vmax.f32 %v621, %v473
        %v624 = vmax.f32 %v622, %v476
        %v625 = vmax.f32 %v623, %v479
        %v626 = vmax.f32 %v624, %v482
        %v627 = vmax.f32 %v625, %v626
        %v628 = vrot.slane %v627, 4
        %v629 = vmax.f32 %v627, %v628
        %v630 = vrot.slane %v629, 2
        %v631 = vmax.f32 %v629, %v630
        %v632 = vrot.slane %v631, 1
        %v633 = vmax.f32 %v631, %v632
        %v634 = vmax.f32 %v502, %v508
        %v635 = vmax.f32 %v505, %v511
        %v636 = vmax.f32 %v634, %v514
        %v637 = vmax.f32 %v635, %v517
        %v638 = vmax.f32 %v636, %v520
        %v639 = vmax.f32 %v637, %v523
        %v640 = vmax.f32 %v638, %v526
        %v641 = vmax.f32 %v639, %v529
        %v642 = vmax.f32 %v640, %v532
        %v643 = vmax.f32 %v641, %v535
        %v644 = vmax.f32 %v642, %v538
        %v645 = vmax.f32 %v643, %v541
        %v646 = vmax.f32 %v644, %v544
        %v647 = vmax.f32 %v645, %v547
        %v648 = vmax.f32 %v646, %v550
        %v649 = vmax.f32 %v647, %v553
        %v650 = vmax.f32 %v648, %v556
        %v651 = vmax.f32 %v649, %v559
        %v652 = vmax.f32 %v650, %v562
        %v653 = vmax.f32 %v651, %v565
        %v654 = vmax.f32 %v652, %v568
        %v655 = vmax.f32 %v653, %v571
        %v656 = vmax.f32 %v654, %v574
        %v657 = vmax.f32 %v655, %v577
        %v658 = vmax.f32 %v656, %v580
        %v659 = vmax.f32 %v657, %v583
        %v660 = vmax.f32 %v658, %v586
        %v661 = vmax.f32 %v659, %v589
        %v662 = vmax.f32 %v660, %v592
        %v663 = vmax.f32 %v661, %v595
        %v664 = vmax.f32 %v662, %v663
        %v665 = vrot.slane %v664, 4
        %v666 = vmax.f32 %v664, %v665
        %v667 = vrot.slane %v666, 2
        %v668 = vmax.f32 %v666, %v667
        %v669 = vrot.slane %v668, 1
        %v670 = vmax.f32 %v668, %v669
        %v671 = vsub.f32 %v389, %v633
        %v672 = vsub.f32 %v502, %v670
        %v673 = vsub.f32 %v392, %v633
        %v674 = vsub.f32 %v505, %v670
        %v675 = vsub.f32 %v395, %v633
        %v676 = vsub.f32 %v508, %v670
        %v677 = vsub.f32 %v398, %v633
        %v678 = vsub.f32 %v511, %v670
        %v679 = vsub.f32 %v401, %v633
        %v680 = vsub.f32 %v514, %v670
        %v681 = vsub.f32 %v404, %v633
        %v682 = vsub.f32 %v517, %v670
        %v683 = vsub.f32 %v407, %v633
        %v684 = vsub.f32 %v520, %v670
        %v685 = vsub.f32 %v410, %v633
        %v686 = vsub.f32 %v523, %v670
        %v687 = vsub.f32 %v413, %v633
        %v688 = vsub.f32 %v526, %v670
        %v689 = vsub.f32 %v416, %v633
        %v690 = vsub.f32 %v529, %v670
        %v691 = vsub.f32 %v419, %v633
        %v692 = vsub.f32 %v532, %v670
        %v693 = vsub.f32 %v422, %v633
        %v694 = vsub.f32 %v535, %v670
        %v695 = vsub.f32 %v425, %v633
        %v696 = vsub.f32 %v538, %v670
        %v697 = vsub.f32 %v428, %v633
        %v698 = vsub.f32 %v541, %v670
        %v699 = vsub.f32 %v431, %v633
        %v700 = vsub.f32 %v544, %v670
        %v701 = vsub.f32 %v434, %v633
        %v702 = vsub.f32 %v547, %v670
        %v703 = vsub.f32 %v437, %v633
        %v704 = vsub.f32 %v550, %v670
        %v705 = vsub.f32 %v440, %v633
        %v706 = vsub.f32 %v553, %v670
        %v707 = vsub.f32 %v443, %v633
        %v708 = vsub.f32 %v556, %v670
        %v709 = vsub.f32 %v446, %v633
        %v710 = vsub.f32 %v559, %v670
        %v711 = vsub.f32 %v449, %v633
        %v712 = vsub.f32 %v562, %v670
        %v713 = vsub.f32 %v452, %v633
        %v714 = vsub.f32 %v565, %v670
        %v715 = vsub.f32 %v455, %v633
        %v716 = vsub.f32 %v568, %v670
        %v717 = vsub.f32 %v458, %v633
        %v718 = vsub.f32 %v571, %v670
        %v719 = vsub.f32 %v461, %v633
        %v720 = vsub.f32 %v574, %v670
        %v721 = vsub.f32 %v464, %v633
        %v722 = vsub.f32 %v577, %v670
        %v723 = vsub.f32 %v467, %v633
        %v724 = vsub.f32 %v580, %v670
        %v725 = vsub.f32 %v470, %v633
        %v726 = vsub.f32 %v583, %v670
        %v727 = vsub.f32 %v473, %v633
        %v728 = vsub.f32 %v586, %v670
        %v729 = vsub.f32 %v476, %v633
        %v730 = vsub.f32 %v589, %v670
        %v731 = vsub.f32 %v479, %v633
        %v732 = vsub.f32 %v592, %v670
        %v733 = vsub.f32 %v482, %v633
        %v734 = vsub.f32 %v595, %v670
        %v735 = vmul.f32 %v671, 1.442695
        %v736 = vpow.pop %v735
        %v737 = vmul.f32 %v672, 1.442695
        %v738 = vpow.pop %v737
        %v739 = vmul.f32 %v673, 1.442695
        %v740 = vpow.pop %v739
        %v741 = vmul.f32 %v674, 1.442695
        %v742 = vpow.pop %v741
        %v743 = vmul.f32 %v675, 1.442695
        %v744 = vpow.pop %v743
        %v745 = vmul.f32 %v676, 1.442695
        %v746 = vpow.pop %v745
        %v747 = vmul.f32 %v677, 1.442695
        %v748 = vpow.pop %v747
        %v749 = vmul.f32 %v678, 1.442695
        %v750 = vpow.pop %v749
        %v751 = vmul.f32 %v679, 1.442695
        %v752 = vpow.pop %v751
        %v753 = vmul.f32 %v680, 1.442695
        %v754 = vpow.pop %v753
        %v755 = vmul.f32 %v681, 1.442695
        %v756 = vpow.pop %v755
        %v757 = vmul.f32 %v682, 1.442695
        %v758 = vpow.pop %v757
        %v759 = vmul.f32 %v683, 1.442695
        %v760 = vpow.pop %v759
        %v761 = vmul.f32 %v684, 1.442695
        %v762 = vpow.pop %v761
        %v763 = vmul.f32 %v685, 1.442695
        %v764 = vpow.pop %v763
        %v765 = vmul.f32 %v686, 1.442695
        %v766 = vpow.pop %v765
        %v767 = vmul.f32 %v687, 1.442695
        %v768 = vpow.pop %v767
        %v769 = vmul.f32 %v688, 1.442695
        %v770 = vpow.pop %v769
        %v771 = vmul.f32 %v689, 1.442695
        %v772 = vpow.pop %v771
        %v773 = vmul.f32 %v690, 1.442695
        %v774 = vpow.pop %v773
        %v775 = vmul.f32 %v691, 1.442695
        %v776 = vpow.pop %v775
        %v777 = vmul.f32 %v692, 1.442695
        %v778 = vpow.pop %v777
        %v779 = vmul.f32 %v693, 1.442695
        %v780 = vpow.pop %v779
        %v781 = vmul.f32 %v694, 1.442695
        %v782 = vpow.pop %v781
        %v783 = vmul.f32 %v695, 1.442695
        %v784 = vpow.pop %v783
        %v785 = vmul.f32 %v696, 1.442695
        %v786 = vpow.pop %v785
        %v787 = vmul.f32 %v697, 1.442695
        %v788 = vpow.pop %v787
        %v789 = vmul.f32 %v698, 1.442695
        %v790 = vpow.pop %v789
        %v791 = vmul.f32 %v699, 1.442695
        %v792 = vpow.pop %v791
        %v793 = vmul.f32 %v700, 1.442695
        %v794 = vpow.pop %v793
        %v795 = vmul.f32 %v701, 1.442695
        %v796 = vpow.pop %v795
        %v797 = vmul.f32 %v702, 1.442695
        %v798 = vpow.pop %v797
        %v799 = vmul.f32 %v703, 1.442695
        %v800 = vpow.pop %v799
        %v801 = vmul.f32 %v704, 1.442695
        %v802 = vpow.pop %v801
        %v803 = vmul.f32 %v705, 1.442695
        %v804 = vpow.pop %v803
        %v805 = vmul.f32 %v706, 1.442695
        %v806 = vpow.pop %v805
        %v807 = vmul.f32 %v707, 1.442695
        %v808 = vpow.pop %v807
        %v809 = vmul.f32 %v708, 1.442695
        %v810 = vpow.pop %v809
        %v811 = vmul.f32 %v709, 1.442695
        %v812 = vpow.pop %v811
        %v813 = vmul.f32 %v710, 1.442695
        %v814 = vpow.pop %v813
        %v815 = vmul.f32 %v711, 1.442695
        %v816 = vpow.pop %v815
        %v817 = vmul.f32 %v712, 1.442695
        %v818 = vpow.pop %v817
        %v819 = vmul.f32 %v713, 1.442695
        %v820 = vpow.pop %v819
        %v821 = vmul.f32 %v714, 1.442695
        %v822 = vpow.pop %v821
        %v823 = vmul.f32 %v715, 1.442695
        %v824 = vpow.pop %v823
        %v825 = vmul.f32 %v716, 1.442695
        %v826 = vpow.pop %v825
        %v827 = vmul.f32 %v717, 1.442695
        %v828 = vpow.pop %v827
        %v829 = vmul.f32 %v718, 1.442695
        %v830 = vpow.pop %v829
        %v831 = vmul.f32 %v719, 1.442695
        %v832 = vpow.pop %v831
        %v833 = vmul.f32 %v720, 1.442695
        %v834 = vpow.pop %v833
        %v835 = vmul.f32 %v721, 1.442695
        %v836 = vpow.pop %v835
        %v837 = vmul.f32 %v722, 1.442695
        %v838 = vpow.pop %v837
        %v839 = vmul.f32 %v723, 1.442695
        %v840 = vpow.pop %v839
        %v841 = vmul.f32 %v724, 1.442695
        %v842 = vpow.pop %v841
        %v843 = vmul.f32 %v725, 1.442695
        %v844 = vpow.pop %v843
        %v845 = vmul.f32 %v726, 1.442695
        %v846 = vpow.pop %v845
        %v847 = vmul.f32 %v727, 1.442695
        %v848 = vpow.pop %v847
        %v849 = vmul.f32 %v728, 1.442695
        %v850 = vpow.pop %v849
        %v851 = vmul.f32 %v729, 1.442695
        %v852 = vpow.pop %v851
        %v853 = vmul.f32 %v730, 1.442695
        %v854 = vpow.pop %v853
        %v855 = vmul.f32 %v731, 1.442695
        %v856 = vpow.pop %v855
        %v857 = vmul.f32 %v732, 1.442695
        %v858 = vpow.pop %v857
        %v859 = vmul.f32 %v733, 1.442695
        %v860 = vpow.pop %v859
        %v861 = vmul.f32 %v734, 1.442695
        %v862 = vpow.pop %v861
        %v863 = vadd.f32 %v736, %v740
        %v864 = vadd.f32 %v863, %v744
        %v865 = vadd.f32 %v864, %v748
        %v866 = vadd.f32 %v865, %v752
        %v867 = vadd.f32 %v866, %v756
        %v868 = vadd.f32 %v867, %v760
        %v869 = vadd.f32 %v868, %v764
        %v870 = vadd.f32 %v869, %v768
        %v871 = vadd.f32 %v870, %v772
        %v872 = vadd.f32 %v871, %v776
        %v873 = vadd.f32 %v872, %v780
        %v874 = vadd.f32 %v873, %v784
        %v875 = vadd.f32 %v874, %v788
        %v876 = vadd.f32 %v875, %v792
        %v877 = vadd.f32 %v876, %v796
        %v878 = vadd.f32 %v877, %v800
        %v879 = vadd.f32 %v878, %v804
        %v880 = vadd.f32 %v879, %v808
        %v881 = vadd.f32 %v880, %v812
        %v882 = vadd.f32 %v881, %v816
        %v883 = vadd.f32 %v882, %v820
        %v884 = vadd.f32 %v883, %v824
        %v885 = vadd.f32 %v884, %v828
        %v886 = vadd.f32 %v885, %v832
        %v887 = vadd.f32 %v886, %v836
        %v888 = vadd.f32 %v887, %v840
        %v889 = vadd.f32 %v888, %v844
        %v890 = vadd.f32 %v889, %v848
        %v891 = vadd.f32 %v890, %v852
        %v892 = vadd.f32 %v891, %v856
        %v893 = vadd.f32 %v892, %v860
        %v894 = vrot.slane %v893, 4
        %v895 = vadd.f32 %v893, %v894
        %v896 = vrot.slane %v895, 2
        %v897 = vadd.f32 %v895, %v896
        %v898 = vrot.slane %v897, 1
        %v899 = vadd.f32 %v897, %v898
        %v900 = vadd.f32 %v738, %v742
        %v901 = vadd.f32 %v900, %v746
        %v902 = vadd.f32 %v901, %v750
        %v903 = vadd.f32 %v902, %v754
        %v904 = vadd.f32 %v903, %v758
        %v905 = vadd.f32 %v904, %v762
        %v906 = vadd.f32 %v905, %v766
        %v907 = vadd.f32 %v906, %v770
        %v908 = vadd.f32 %v907, %v774
        %v909 = vadd.f32 %v908, %v778
        %v910 = vadd.f32 %v909, %v782
        %v911 = vadd.f32 %v910, %v786
        %v912 = vadd.f32 %v911, %v790
        %v913 = vadd.f32 %v912, %v794
        %v914 = vadd.f32 %v913, %v798
        %v915 = vadd.f32 %v914, %v802
        %v916 = vadd.f32 %v915, %v806
        %v917 = vadd.f32 %v916, %v810
        %v918 = vadd.f32 %v917, %v814
        %v919 = vadd.f32 %v918, %v818
        %v920 = vadd.f32 %v919, %v822
        %v921 = vadd.f32 %v920, %v826
        %v922 = vadd.f32 %v921, %v830
        %v923 = vadd.f32 %v922, %v834
        %v924 = vadd.f32 %v923, %v838
        %v925 = vadd.f32 %v924, %v842
        %v926 = vadd.f32 %v925, %v846
        %v927 = vadd.f32 %v926, %v850
        %v928 = vadd.f32 %v927, %v854
        %v929 = vadd.f32 %v928, %v858
        %v930 = vadd.f32 %v929, %v862
        %v931 = vrot.slane %v930, 4
        %v932 = vadd.f32 %v930, %v931
        %v933 = vrot.slane %v932, 2
        %v934 = vadd.f32 %v932, %v933
        %v935 = vrot.slane %v934, 1
        %v936 = vadd.f32 %v934, %v935
        %v937 = vrcp.pop %v899
        %v938 = vrcp.pop %v936
        %v939 = vmul.f32 %v736, %v937
        %v940 = vmul.f32 %v738, %v938
        %v941 = vmul.f32 %v740, %v937
        %v942 = vmul.f32 %v742, %v938
        %v943 = vmul.f32 %v744, %v937
        %v944 = vmul.f32 %v746, %v938
        %v945 = vmul.f32 %v748, %v937
        %v946 = vmul.f32 %v750, %v938
        %v947 = vmul.f32 %v752, %v937
        %v948 = vmul.f32 %v754, %v938
        %v949 = vmul.f32 %v756, %v937
        %v950 = vmul.f32 %v758, %v938
        %v951 = vmul.f32 %v760, %v937
        %v952 = vmul.f32 %v762, %v938
        %v953 = vmul.f32 %v764, %v937
        %v954 = vmul.f32 %v766, %v938
        %v955 = vmul.f32 %v768, %v937
        %v956 = vmul.f32 %v770, %v938
        %v957 = vmul.f32 %v772, %v937
        %v958 = vmul.f32 %v774, %v938
        %v959 = vmul.f32 %v776, %v937
        %v960 = vmul.f32 %v778, %v938
        %v961 = vmul.f32 %v780, %v937
        %v962 = vmul.f32 %v782, %v938
        %v963 = vmul.f32 %v784, %v937
        %v964 = vmul.f32 %v786, %v938
        %v965 = vmul.f32 %v788, %v937
        %v966 = vmul.f32 %v790, %v938
        %v967 = vmul.f32 %v792, %v937
        %v968 = vmul.f32 %v794, %v938
        %v969 = vmul.f32 %v796, %v937
        %v970 = vmul.f32 %v798, %v938
        %v971 = vmul.f32 %v800, %v937
        %v972 = vmul.f32 %v802, %v938
        %v973 = vmul.f32 %v804, %v937
        %v974 = vmul.f32 %v806, %v938
        %v975 = vmul.f32 %v808, %v937
        %v976 = vmul.f32 %v810, %v938
        %v977 = vmul.f32 %v812, %v937
        %v978 = vmul.f32 %v814, %v938
        %v979 = vmul.f32 %v816, %v937
        %v980 = vmul.f32 %v818, %v938
        %v981 = vmul.f32 %v820, %v937
        %v982 = vmul.f32 %v822, %v938
        %v983 = vmul.f32 %v824, %v937
        %v984 = vmul.f32 %v826, %v938
        %v985 = vmul.f32 %v828, %v937
        %v986 = vmul.f32 %v830, %v938
        %v987 = vmul.f32 %v832, %v937
        %v988 = vmul.f32 %v834, %v938
        %v989 = vmul.f32 %v836, %v937
        %v990 = vmul.f32 %v838, %v938
        %v991 = vmul.f32 %v840, %v937
        %v992 = vmul.f32 %v842, %v938
        %v993 = vmul.f32 %v844, %v937
        %v994 = vmul.f32 %v846, %v938
        %v995 = vmul.f32 %v848, %v937
        %v996 = vmul.f32 %v850, %v938
        %v997 = vmul.f32 %v852, %v937
        %v998 = vmul.f32 %v854, %v938
        %v999 = vmul.f32 %v856, %v937
        %v1000 = vmul.f32 %v858, %v938
        %v1001 = vmul.f32 %v860, %v937
        %v1002 = vmul.f32 %v862, %v938
        %v1003 = vpack.c.bf16 %v940, %v939
        %v1004 = vpack.c.bf16 %v942, %v941
        %v1005 = vpack.c.bf16 %v944, %v943
        %v1006 = vpack.c.bf16 %v946, %v945
        %v1007 = vpack.c.bf16 %v948, %v947
        %v1008 = vpack.c.bf16 %v950, %v949
        %v1009 = vpack.c.bf16 %v952, %v951
        %v1010 = vpack.c.bf16 %v954, %v953
        %v1011 = vpack.c.bf16 %v956, %v955
        %v1012 = vpack.c.bf16 %v958, %v957
        %v1013 = vpack.c.bf16 %v960, %v959
        %v1014 = vpack.c.bf16 %v962, %v961
        %v1015 = vpack.c.bf16 %v964, %v963
        %v1016 = vpack.c.bf16 %v966, %v965
        %v1017 = vpack.c.bf16 %v968, %v967
        %v1018 = vpack.c.bf16 %v970, %v969
        %v1019 = vpack.c.bf16 %v972, %v971
        %v1020 = vpack.c.bf16 %v974, %v973
        %v1021 = vpack.c.bf16 %v976, %v975
        %v1022 = vpack.c.bf16 %v978, %v977
        %v1023 = vpack.c.bf16 %v980, %v979
        %v1024 = vpack.c.bf16 %v982, %v981
        %v1025 = vpack.c.bf16 %v984, %v983
        %v1026 = vpack.c.bf16 %v986, %v985
        %v1027 = vpack.c.bf16 %v988, %v987
        %v1028 = vpack.c.bf16 %v990, %v989
        %v1029 = vpack.c.bf16 %v992, %v991
        %v1030 = vpack.c.bf16 %v994, %v993
        %v1031 = vpack.c.bf16 %v996, %v995
        %v1032 = vpack.c.bf16 %v998, %v997
        %v1033 = vpack.c.bf16 %v1000, %v999
        %v1034 = vpack.c.bf16 %v1002, %v1001
        %1035 = vst [vmem:[%s176] sm:$0xff] %v1003
        %1036 = vst [vmem:[%s176 + $0x8] sm:$0xff] %v1004
        %1037 = vst [vmem:[%s176 + $0x10] sm:$0xff] %v1005
        %1038 = vst [vmem:[%s176 + $0x18] sm:$0xff] %v1006
        %1039 = vst [vmem:[%s176 + $0x20] sm:$0xff] %v1007
        %1040 = vst [vmem:[%s176 + $0x28] sm:$0xff] %v1008
        %1041 = vst [vmem:[%s176 + $0x30] sm:$0xff] %v1009
        %1042 = vst [vmem:[%s176 + $0x38] sm:$0xff] %v1010
        %1043 = vst [vmem:[%s176 + $0x40] sm:$0xff] %v1011
        %1044 = vst [vmem:[%s176 + $0x48] sm:$0xff] %v1012
        %1045 = vst [vmem:[%s176 + $0x50] sm:$0xff] %v1013
        %1046 = vst [vmem:[%s176 + $0x58] sm:$0xff] %v1014
        %1047 = vst [vmem:[%s176 + $0x60] sm:$0xff] %v1015
        %1048 = vst [vmem:[%s176 + $0x68] sm:$0xff] %v1016
        %1049 = vst [vmem:[%s176 + $0x70] sm:$0xff] %v1017
        %1050 = vst [vmem:[%s176 + $0x78] sm:$0xff] %v1018
        %1051 = vst [vmem:[%s176 + $0x80] sm:$0xff] %v1019
        %1052 = vst [vmem:[%s176 + $0x88] sm:$0xff] %v1020
        %1053 = vst [vmem:[%s176 + $0x90] sm:$0xff] %v1021
        %1054 = vst [vmem:[%s176 + $0x98] sm:$0xff] %v1022
        %1055 = vst [vmem:[%s176 + $0xa0] sm:$0xff] %v1023
        %1056 = vst [vmem:[%s176 + $0xa8] sm:$0xff] %v1024
        %1057 = vst [vmem:[%s176 + $0xb0] sm:$0xff] %v1025
        %1058 = vst [vmem:[%s176 + $0xb8] sm:$0xff] %v1026
        %1059 = vst [vmem:[%s176 + $0xc0] sm:$0xff] %v1027
        %1060 = vst [vmem:[%s176 + $0xc8] sm:$0xff] %v1028
        %1061 = vst [vmem:[%s176 + $0xd0] sm:$0xff] %v1029
        %1062 = vst [vmem:[%s176 + $0xd8] sm:$0xff] %v1030
        %1063 = vst [vmem:[%s176 + $0xe0] sm:$0xff] %v1031
        %1064 = vst [vmem:[%s176 + $0xe8] sm:$0xff] %v1032
        %1065 = vst [vmem:[%s176 + $0xf0] sm:$0xff] %v1033
        %1066 = vst [vmem:[%s176 + $0xf8] sm:$0xff] %v1034
        %s1067 = sand.u32 %s92, 1
        %s1068 = scalar_lea.sflag [#allocation3], %s1067
        %s1069 = sand.u32 %s92, 1
        %s1070 = smul.addr %s1069, 256
        %s1071 = scalar_lea.vmem [#allocation2], %s1070
        // Predicated region
        $region29: #{_forward_no_color.1} parent=27 // pred_check
          %p1072 = pneg %p102
        $region30: #{_forward_no_color.1} parent=27 // pred_check_branch
          %1074 = sbr.rel (%p1072) target = $region32
        $region31: #{_forward_no_color.1} parent=27 // pred_region
          %s1075 = smul.u32 2, %s21
          %1077 = vsyncadd %s1068, 0
          %s1078 = smul.addr %s20, 64
          %s1079 = sadd.s32 %s1075, %s1078
          %s1080 = smul.addr %s1079, 4
          %s1081 = scalar_lea.hbm %s2, %s1080
          %s1082 = sshll.u32 %s1071, 4
          %s1083 = int_to_ptr.vmem [resolvable:$true] %s1082
          %s1084 = sshll.u32 %s1081, 4
          %s1085 = int_to_ptr.hbm [resolvable:$true] %s1084
          %1090 = dma.vmem_to_hbm [thread:$0]  %s1083, 4096, %s1085, %s1068, 128, 128, 8
        $region32: #{_forward_no_color.1} parent=27 // pred_fallthru
          _
      $region28: #{_forward_no_color.1} parent=5 // pred_fallthru
        _
      %p1091 = scmp.le.s32.totalorder 2, %s11
      // Predicated region
      $region33: #{_forward_no_color.1} parent=5 // pred_check
        %p1092 = pneg %p1091
      $region34: #{_forward_no_color.1} parent=5 // pred_check_branch
        %1094 = sbr.rel (%p1092) target = $region36
      $region35: #{_forward_no_color.1} parent=5 // pred_region
        %s1095 = ssub.s32 %s11, 2
        // Predicated region
        $region37: #{_forward_no_color.1} parent=35 // pred_check
          %p1096 = pneg %p108
        $region38: #{_forward_no_color.1} parent=35 // pred_check_branch
          %1098 = sbr.rel (%p1096) target = $region40
        $region39: #{_forward_no_color.1} parent=35 // pred_region
          %s1099 = sand.u32 %s93, 1
          %s1100 = scalar_lea.sflag [#allocation3], %s1099
          %s1101 = sand.u32 %s93, 1
          %s1102 = smul.addr %s1101, 256
          %s1103 = scalar_lea.vmem [#allocation2], %s1102
          %1105 = dma.done %s1100, 4096
        $region40: #{_forward_no_color.1} parent=35 // pred_fallthru
          _
      $region36: #{_forward_no_color.1} parent=5 // pred_fallthru
        _
    $region6: #{_forward_no_color.1} parent=1 // loop_footer
      %s15 = sadd.s32 1, %s11
    $region7: #{_forward_no_color.1} parent=1 // loop_footer_branch
      %10 = sbr.rel target = $region3
    $region8: #{_forward_no_color.1} parent=1 // loop_exit
      _
    %1106 = vsyncpa [#allocation3], 1
    %s1107 = scalar_lea.sflag [#allocation3], 1
    %1108 = vsyncpa %s1107, 1

</llo_original>
